<compile_context>
chip_gen: v6e
topology: v6e:2x2x1
jax: 0.10.0
libtpu: 0.0.40
codegen_flags: <defaults>
</compile_context>

<pallas_src>
import functools

import numpy as np
import jax
import jax.numpy as jnp
from jax.experimental import pallas as pl
from jax.experimental.pallas import tpu as pltpu


def _round_up(x, m):
    return ((x + m - 1) // m) * m


def _pick_row_tile(m):
    """Row-tile (multiple of 8) and padded row count; avoids padding if possible."""
    mp8 = _round_up(m, 8)
    for cand in (256, 128, 64):
        if mp8 % cand == 0:
            return cand, mp8
    if mp8 <= 512:
        return mp8, mp8
    return 256, _round_up(mp8, 256)


# ----------------------------- Pallas kernels -----------------------------

_MAX_TK = 2304  # largest single K block; bf16 tiles stay well inside VMEM


def _mm_kernel(a_ref, b_ref, bias_ref, o_ref, *, relu):
    # Single K block: bf16 operands, f32 MXU accumulation, f32 epilogue.
    acc = jnp.dot(a_ref[...], b_ref[...], preferred_element_type=jnp.float32)
    r = acc + bias_ref[...]
    if relu:
        r = jnp.maximum(r, 0.0)
    o_ref[...] = r.astype(o_ref.dtype)


def _mm_res_kernel(a_ref, b_ref, bias_ref, res_ref, o_ref, *, relu):
    # Residual add (+ ReLU) fused into the matmul epilogue.
    acc = jnp.dot(a_ref[...], b_ref[...], preferred_element_type=jnp.float32)
    r = acc + bias_ref[...] + res_ref[...].astype(jnp.float32)
    if relu:
        r = jnp.maximum(r, 0.0)
    o_ref[...] = r.astype(o_ref.dtype)


def _mm_acc_kernel(a_ref, b_ref, bias_ref, o_ref, acc_ref, *, relu):
    # K split across the last grid axis; f32 VMEM accumulator.
    k = pl.program_id(2)

    @pl.when(k == 0)
    def _():
        acc_ref[...] = jnp.zeros_like(acc_ref)

    acc_ref[...] += jnp.dot(a_ref[...], b_ref[...],
                            preferred_element_type=jnp.float32)

    @pl.when(k == pl.num_programs(2) - 1)
    def _():
        r = acc_ref[...] + bias_ref[...]
        if relu:
            r = jnp.maximum(r, 0.0)
        o_ref[...] = r.astype(o_ref.dtype)


def matmul_bias(a, w, bias, *, relu=False, residual=None,
                out_dtype=jnp.bfloat16):
    """act(a @ w + bias [+ residual]) on the MXU (bf16 in, f32 accumulate)."""
    M, K = a.shape
    K2, N = w.shape
    assert K == K2

    a = a.astype(jnp.bfloat16)
    w = w.astype(jnp.bfloat16)
    bias = bias.astype(jnp.float32).reshape(1, N)
    if residual is not None:
        residual = residual.astype(jnp.bfloat16)

    # N tiling: never pad N (tn == N, or a 128-multiple divisor of N).
    if N <= 512:
        tn = N
    else:
        tn = 512 if N % 512 == 0 else 128
        assert N % tn == 0, f"unsupported N={N}"

    # M tiling: pad rows only when no friendly divisor exists.
    tm, Mp = _pick_row_tile(M)
    if Mp != M:
        a = jnp.pad(a, ((0, Mp - M), (0, 0)))
        if residual is not None:
            residual = jnp.pad(residual, ((0, Mp - M), (0, 0)))

    # K tiling: take K whole when it fits, else the largest 128-multiple divisor.
    if K <= _MAX_TK:
        tk = K
    else:
        tk = K
        for cand in range(_MAX_TK - (_MAX_TK % 128), 127, -128):
            if K % cand == 0:
                tk = cand
                break
    nk = K // tk

    if nk == 1:
        # Fast path (all 1x1 convs, fc, most 3x3 convs): no accumulator scratch.
        grid = (Mp // tm, N // tn)
        in_specs = [
            pl.BlockSpec((tm, K), lambda i, j: (i, 0)),
            pl.BlockSpec((K, tn), lambda i, j: (0, j)),
            pl.BlockSpec((1, tn), lambda i, j: (0, j)),
        ]
        operands = [a, w, bias]
        if residual is not None:
            in_specs.append(pl.BlockSpec((tm, tn), lambda i, j: (i, j)))
            operands.append(residual)
            kernel = functools.partial(_mm_res_kernel, relu=relu)
        else:
            kernel = functools.partial(_mm_kernel, relu=relu)
        out = pl.pallas_call(
            kernel,
            out_shape=jax.ShapeDtypeStruct((Mp, N), out_dtype),
            grid_spec=pltpu.PrefetchScalarGridSpec(
                num_scalar_prefetch=0,
                grid=grid,
                in_specs=in_specs,
                out_specs=pl.BlockSpec((tm, tn), lambda i, j: (i, j)),
            ),
            compiler_params=pltpu.CompilerParams(
                dimension_semantics=("parallel", "parallel")),
        )(*operands)
    else:
        assert residual is None, "residual fusion only on the single-K path"
        grid = (Mp // tm, N // tn, nk)
        out = pl.pallas_call(
            functools.partial(_mm_acc_kernel, relu=relu),
            out_shape=jax.ShapeDtypeStruct((Mp, N), out_dtype),
            grid_spec=pltpu.PrefetchScalarGridSpec(
                num_scalar_prefetch=0,
                grid=grid,
                in_specs=[
                    pl.BlockSpec((tm, tk), lambda i, j, k: (i, k)),
                    pl.BlockSpec((tk, tn), lambda i, j, k: (k, j)),
                    pl.BlockSpec((1, tn), lambda i, j, k: (0, j)),
                ],
                out_specs=pl.BlockSpec((tm, tn), lambda i, j, k: (i, j)),
                scratch_shapes=[pltpu.VMEM((tm, tn), jnp.float32)],
            ),
            compiler_params=pltpu.CompilerParams(
                dimension_semantics=("parallel", "parallel", "arbitrary")),
        )(a, w, bias)

    if Mp != M:
        out = out[:M]
    return out


def _max_reduce_kernel(x_ref, o_ref):
    o_ref[...] = jnp.max(x_ref[...].astype(jnp.float32),
                         axis=1).astype(o_ref.dtype)


def _mean_reduce_kernel(x_ref, o_ref):
    o_ref[...] = jnp.mean(x_ref[...].astype(jnp.float32),
                          axis=1).astype(o_ref.dtype)


# ------------------------------ layer helpers ------------------------------

def _im2col(x, kh, kw, stride, pad):
    B, H, W, C = x.shape
    Ho = (H + 2 * pad - kh) // stride + 1
    Wo = (W + 2 * pad - kw) // stride + 1
    xp = jnp.pad(x, ((0, 0), (pad, pad), (pad, pad), (0, 0)))
    cols = []
    for i in range(kh):
        for j in range(kw):
            cols.append(xp[:, i:i + stride * (Ho - 1) + 1:stride,
                            j:j + stride * (Wo - 1) + 1:stride, :])
    return jnp.concatenate(cols, axis=-1), Ho, Wo  # (B, Ho, Wo, kh*kw*C)


def conv_apply(x, conv, *, stride, pad, relu, residual=None):
    """conv (BN folded) as a Pallas matmul; optional fused residual+ReLU."""
    w2d, bias, kh, kw = conv
    cout = w2d.shape[1]
    x = x.astype(jnp.bfloat16)
    B = x.shape[0]
    if kh == 1 and kw == 1:
        assert pad == 0
        if stride > 1:
            x = x[:, ::stride, ::stride, :]
        _, Ho, Wo, cin = x.shape
        a = x.reshape(B * Ho * Wo, cin)
    else:
        patches, Ho, Wo = _im2col(x, kh, kw, stride, pad)
        a = patches.reshape(B * Ho * Wo, kh * kw * x.shape[-1])
    res2d = None
    if residual is not None:
        res2d = residual.astype(jnp.bfloat16).reshape(B * Ho * Wo, cout)
    y = matmul_bias(a, w2d, bias, relu=relu, residual=res2d,
                    out_dtype=jnp.bfloat16)
    return y.reshape(B, Ho, Wo, cout)


def max_pool(x, *, k, stride, pad):
    B, H, W, C = x.shape
    x = x.astype(jnp.bfloat16)
    Ho = (H + 2 * pad - k) // stride + 1
    Wo = (W + 2 * pad - k) // stride + 1
    xp = jnp.pad(x, ((0, 0), (pad, pad), (pad, pad), (0, 0)),
                 constant_values=-jnp.inf)
    wins = [xp[:, i:i + stride * (Ho - 1) + 1:stride,
               j:j + stride * (Wo - 1) + 1:stride, :]
            for i in range(k) for j in range(k)]
    M = B * Ho * Wo
    patches = jnp.stack(wins, axis=3).reshape(M, k * k, C)
    tm, Mp = _pick_row_tile(M)
    if Mp != M:
        patches = jnp.pad(patches, ((0, Mp - M), (0, 0), (0, 0)))
    out = pl.pallas_call(
        _max_reduce_kernel,
        out_shape=jax.ShapeDtypeStruct((Mp, C), jnp.bfloat16),
        grid_spec=pltpu.PrefetchScalarGridSpec(
            num_scalar_prefetch=0,
            grid=(Mp // tm,),
            in_specs=[pl.BlockSpec((tm, k * k, C), lambda i: (i, 0, 0))],
            out_specs=pl.BlockSpec((tm, C), lambda i: (i, 0)),
        ),
        compiler_params=pltpu.CompilerParams(
            dimension_semantics=("parallel",)),
    )(patches)
    if Mp != M:
        out = out[:M]
    return out.reshape(B, Ho, Wo, C)


def global_avg_pool(x):
    B, H, W, C = x.shape
    xr = x.astype(jnp.bfloat16).reshape(B, H * W, C)
    bb = 8 if B % 8 == 0 else B
    return pl.pallas_call(
        _mean_reduce_kernel,
        out_shape=jax.ShapeDtypeStruct((B, C), jnp.float32),
        grid_spec=pltpu.PrefetchScalarGridSpec(
            num_scalar_prefetch=0,
            grid=(B // bb,),
            in_specs=[pl.BlockSpec((bb, H * W, C), lambda i: (i, 0, 0))],
            out_specs=pl.BlockSpec((bb, C), lambda i: (i, 0)),
        ),
        compiler_params=pltpu.CompilerParams(
            dimension_semantics=("parallel",)),
    )(xr)


# ------------------------------- parameters --------------------------------

_EPS = 1e-5
LAYER_CFG = [(64, 3, 1), (128, 8, 2), (256, 36, 2), (512, 3, 2)]  # ResNet-152
EXPANSION = 4
NUM_CLASSES = 120


def _folded_conv(key, cin, cout, kh, kw, gamma):
    # He-normal conv weight; eval-mode BN (mean=0, var=1, beta=0, gamma=gamma)
    # folded in.  Stored pre-reshaped to (kh*kw*cin, cout) in bf16 so the
    # forward pass never repacks weights.
    w = jax.random.normal(key, (kh, kw, cin, cout), jnp.float32)
    w = w * np.sqrt(2.0 / (cin * kh * kw)) * (gamma / np.sqrt(1.0 + _EPS))
    w2d = w.reshape(kh * kw * cin, cout).astype(jnp.bfloat16)
    bias = jnp.zeros((1, cout), jnp.float32)
    return (w2d, bias, kh, kw)


def init_params(key):
    ctr = [0]

    def nk():
        ctr[0] += 1
        return jax.random.fold_in(key, ctr[0])

    params = {"conv1": _folded_conv(nk(), 3, 64, 7, 7, 1.0)}
    inplanes = 64
    blocks = []
    for planes, n_blocks, stride in LAYER_CFG:
        for b in range(n_blocks):
            s = stride if b == 0 else 1
            blk = {
                "conv1": _folded_conv(nk(), inplanes, planes, 1, 1, 1.0),
                "conv2": _folded_conv(nk(), planes, planes, 3, 3, 1.0),
                # small gamma on the last BN keeps the random (untrained)
                # residual branch numerically tame across 50 blocks.
                "conv3": _folded_conv(nk(), planes, planes * EXPANSION, 1, 1, 0.1),
                "stride": s,
            }
            if b == 0 and (s != 1 or inplanes != planes * EXPANSION):
                blk["downsample"] = _folded_conv(nk(), inplanes,
                                                 planes * EXPANSION, 1, 1, 1.0)
            blocks.append(blk)
            inplanes = planes * EXPANSION
    params["blocks"] = blocks

    in_features = 512 * EXPANSION  # 2048, like resnet152.fc.in_features
    bound = 1.0 / np.sqrt(in_features)
    params["fc_w"] = jax.random.uniform(nk(), (in_features, NUM_CLASSES),
                                        jnp.float32, -bound,
                                        bound).astype(jnp.bfloat16)
    params["fc_b"] = jax.random.uniform(nk(), (1, NUM_CLASSES),
                                        jnp.float32, -bound, bound)
    return params


# -------------------------------- forward ----------------------------------

def bottleneck(x, blk):
    stride = blk["stride"]
    if "downsample" in blk:
        identity = conv_apply(x, blk["downsample"], stride=stride, pad=0,
                              relu=False)
    else:
        identity = x
    out = conv_apply(x, blk["conv1"], stride=1, pad=0, relu=True)
    out = conv_apply(out, blk["conv2"], stride=stride, pad=1, relu=True)
    # conv3 with the residual add + final ReLU fused into the matmul epilogue.
    out = conv_apply(out, blk["conv3"], stride=1, pad=0, relu=True,
                     residual=identity)
    return out


def resnet_forward(params, x_nchw):
    x = jnp.transpose(x_nchw, (0, 2, 3, 1)).astype(jnp.bfloat16)  # NCHW->NHWC
    x = conv_apply(x, params["conv1"], stride=2, pad=3, relu=True)
    x = max_pool(x, k=3, stride=2, pad=1)
    for blk in params["blocks"]:
        x = bottleneck(x, blk)
    feat = global_avg_pool(x)                       # (B, 2048) == reshape(x, (B, -1))
    logits = matmul_bias(feat, params["fc_w"], params["fc_b"], relu=False,
                         out_dtype=jnp.float32)
    return logits                                   # (B, 120)


if __name__ == "__main__":
    key = jax.random.PRNGKey(0)
    params = init_params(key)
    x = jax.random.normal(jax.random.fold_in(key, 12345),
                          (2, 3, 16, 16), jnp.float32)  # small NCHW input
    out = resnet_forward(params, x)
    out = jax.block_until_ready(out)
    assert out.shape == (2, NUM_CLASSES), out.shape
    assert bool(jnp.all(jnp.isfinite(out)))
    print("KERNEL_OK")
</pallas_src>

<mosaic_0001>
module attributes {stable_mosaic.version = 11 : i64} {
  func.func @_mm_kernel(%arg0: i32, %arg1: i32, %arg2: memref<128x147xbf16, #tpu.memory_space<vmem>>, %arg3: memref<147x64xbf16, #tpu.memory_space<vmem>>, %arg4: memref<1x64xf32, #tpu.memory_space<vmem>>, %arg5: memref<128x64xbf16, #tpu.memory_space<vmem>>) attributes {dimension_semantics = [#tpu.dimension_semantics<parallel>, #tpu.dimension_semantics<parallel>], iteration_bounds = array<i64: 1, 1>, scalar_prefetch = 0 : i64, scratch_operands = 0 : i64, tpu.core_type = #tpu.core_type<tc>, window_params = [{transform_indices = @transform_0, window_bounds = array<i64: 128, 147>}, {transform_indices = @transform_1, window_bounds = array<i64: 147, 64>}, {transform_indices = @transform_2, window_bounds = array<i64: 1, 64>}, {transform_indices = @transform_3, window_bounds = array<i64: 128, 64>}]} {
    %c0 = arith.constant 0 : index
    %c0_0 = arith.constant 0 : index
    %0 = vector.load %arg2[%c0, %c0_0] : memref<128x147xbf16, #tpu.memory_space<vmem>>, vector<128x147xbf16>
    %c0_1 = arith.constant 0 : index
    %c0_2 = arith.constant 0 : index
    %1 = vector.load %arg3[%c0_1, %c0_2] : memref<147x64xbf16, #tpu.memory_space<vmem>>, vector<147x64xbf16>
    %cst = arith.constant dense<0.000000e+00> : vector<128x64xf32>
    %2 = tpu.matmul %0, %1, %cst {dimension_numbers = #tpu.dot_dimension_numbers<[1], [0], [0], [1], [0, 0, 1, 1], [], []>} : vector<128x147xbf16>, vector<147x64xbf16>, vector<128x64xf32> -> vector<128x64xf32>
    %c0_3 = arith.constant 0 : index
    %c0_4 = arith.constant 0 : index
    %3 = vector.load %arg4[%c0_3, %c0_4] : memref<1x64xf32, #tpu.memory_space<vmem>>, vector<1x64xf32>
    %4 = vector.broadcast %3 : vector<1x64xf32> to vector<128x64xf32>
    %5 = arith.addf %2, %4 : vector<128x64xf32>
    %cst_5 = arith.constant 0.000000e+00 : f32
    %6 = vector.broadcast %cst_5 : f32 to vector<128x64xf32>
    %7 = arith.maximumf %5, %6 : vector<128x64xf32>
    %8 = arith.truncf %7 : vector<128x64xf32> to vector<128x64xbf16>
    %c0_6 = arith.constant 0 : index
    %c0_7 = arith.constant 0 : index
    %9 = vector.load %arg5[%c0_6, %c0_7] : memref<128x64xbf16, #tpu.memory_space<vmem>>, vector<128x64xbf16>
    tpu.vector_store %arg5[%c0_6, %c0_7], %8 {strides = array<i32>} : memref<128x64xbf16, #tpu.memory_space<vmem>>, vector<128x64xbf16>,
    return
  }
  func.func @transform_0(%arg0: i32, %arg1: i32) -> (i32, i32) {
    %c0_i32 = arith.constant 0 : i32
    %c0_i32_0 = arith.constant 0 : i32
    return %arg0, %c0_i32 : i32, i32
  }
  func.func @transform_1(%arg0: i32, %arg1: i32) -> (i32, i32) {
    %c0_i32 = arith.constant 0 : i32
    %c0_i32_0 = arith.constant 0 : i32
    return %c0_i32, %arg1 : i32, i32
  }
  func.func @transform_2(%arg0: i32, %arg1: i32) -> (i32, i32) {
    %c0_i32 = arith.constant 0 : i32
    %c0_i32_0 = arith.constant 0 : i32
    return %c0_i32, %arg1 : i32, i32
  }
  func.func @transform_3(%arg0: i32, %arg1: i32) -> (i32, i32) {
    %c0_i32 = arith.constant 0 : i32
    return %arg0, %arg1 : i32, i32
  }
}

</mosaic_0001>

<llo_original>
// kernel: tpu_custom_call.1
$region0: #{tpu_custom_call.1}
  #allocation0 [shape = 'u32[]', space=smem, size = 0x4, offset = 0x4, fixed_abs, tag = 'smem constant byte address 0x4 - core index']
  #allocation1 [shape = 'u32[144,128]{1,0:T(1,128)}', space=vmem, size = 0x12000, scoped, tag = 'internal scratch']
  %s0 = inlined_call_operand.vmem [shape: bf16[128,147], index: 0, kind: input, shape index: {}]
  %s1 = inlined_call_operand.vmem [shape: bf16[147,64], index: 1, kind: input, shape index: {}]
  %s2 = inlined_call_operand.vmem [shape: f32[1,64], index: 2, kind: input, shape index: {}]
  %s3 = inlined_call_operand.vmem [shape: bf16[128,64], index: 3, kind: output, shape index: {}]
  %s4 = sld [smem:[#allocation0]]
  $region22: #{tpu_custom_call.1} parent=0
    _
  %s6 = ssub.s32 1, %s4
  %s7 = scalar_select 0, %s6, %s4
  // Predicated region
  $region2: #{tpu_custom_call.1} parent=0 // pred_check
    _
  $region3: #{tpu_custom_call.1} parent=0 // pred_check_branch
    %9 = sbr.rel (0) target = $region5
  $region4: #{tpu_custom_call.1} parent=0 // pred_region
    _
  $region5: #{tpu_custom_call.1} parent=0 // pred_fallthru
    _
  // Predicated region
  $region6: #{tpu_custom_call.1} parent=0 // pred_check
    _
  $region7: #{tpu_custom_call.1} parent=0 // pred_check_branch
    %11 = sbr.rel (0) target = $region9
  $region8: #{tpu_custom_call.1} parent=0 // pred_region
    _
  $region9: #{tpu_custom_call.1} parent=0 // pred_fallthru
    _
  // Predicated region
  $region10: #{tpu_custom_call.1} parent=0 // pred_check
    _
  $region11: #{tpu_custom_call.1} parent=0 // pred_check_branch
    %13 = sbr.rel (0) target = $region13
  $region12: #{tpu_custom_call.1} parent=0 // pred_region
    _
  $region13: #{tpu_custom_call.1} parent=0 // pred_fallthru
    _
  %v15 = vld [vmem:[%s0] sm:$0xff]
  %v16 = vld [vmem:[%s0 + $0x8] sm:$0xff]
  %v17 = vld [vmem:[%s0 + $0x10] sm:$0xff]
  %v18 = vld [vmem:[%s0 + $0x18] sm:$0xff]
  %v19 = vld [vmem:[%s0 + $0x20] sm:$0xff]
  %v20 = vld [vmem:[%s0 + $0x28] sm:$0xff]
  %v21 = vld [vmem:[%s0 + $0x30] sm:$0xff]
  %v22 = vld [vmem:[%s0 + $0x38] sm:$0xff]
  %v23 = vld [vmem:[%s0 + $0x40] sm:$0xff]
  %v24 = vld [vmem:[%s0 + $0x48] sm:$0xff]
  %v25 = vld [vmem:[%s0 + $0x50] sm:$0xff]
  %v26 = vld [vmem:[%s0 + $0x58] sm:$0xff]
  %v27 = vld [vmem:[%s0 + $0x60] sm:$0xff]
  %v28 = vld [vmem:[%s0 + $0x68] sm:$0xff]
  %v29 = vld [vmem:[%s0 + $0x70] sm:$0xff]
  %v30 = vld [vmem:[%s0 + $0x78] sm:$0xff]
  %v31 = vld [vmem:[%s1] sm:$0xf]
  %v32 = vld [vmem:[%s1 + $0x4] sm:$0xf]
  %v33 = vld [vmem:[%s1 + $0x8] sm:$0xf]
  %v34 = vld [vmem:[%s1 + $0xc] sm:$0xf]
  %v35 = vld [vmem:[%s1 + $0x10] sm:$0xf]
  %v36 = vld [vmem:[%s1 + $0x14] sm:$0xf]
  %v37 = vld [vmem:[%s1 + $0x18] sm:$0xf]
  %v38 = vld [vmem:[%s1 + $0x1c] sm:$0xf]
  %v39 = vld [vmem:[%s1 + $0x20] sm:$0xf]
  %v40 = vld [vmem:[%s1 + $0x24] sm:$0xf]
  %v41 = vld [vmem:[%s1 + $0x28] sm:$0xf]
  %v42 = vld [vmem:[%s1 + $0x2c] sm:$0xf]
  %v43 = vld [vmem:[%s1 + $0x30] sm:$0xf]
  %v44 = vld [vmem:[%s1 + $0x34] sm:$0xf]
  %v45 = vld [vmem:[%s1 + $0x38] sm:$0xf]
  %v46 = vld [vmem:[%s1 + $0x3c] sm:$0xf]
  %v47 = vld [vmem:[%s1 + $0x40] sm:$0xf]
  %v48 = vld [vmem:[%s1 + $0x44] sm:$0xf]
  %v49 = vld [vmem:[%s1 + $0x48] sm:$0x3]
  %v50 = vld [vmem:[%s2] sm:$0x1]
  %v52 = vlaneseq
  %v53 = vshrl.u32 %v52, 7
  %v54 = vsub.s32 0, %v53
  %v55 = vrot.slane %v50, %v54
  %v73 = vunpack.c.l.b16 %v15
  %v74 = vunpack.c.h.b16 %v15
  %v75 = vunpack.c.l.b16 %v16
  %v76 = vunpack.c.h.b16 %v16
  %v77 = vunpack.c.l.b16 %v17
  %v78 = vunpack.c.h.b16 %v17
  %v79 = vunpack.c.l.b16 %v18
  %v80 = vunpack.c.h.b16 %v18
  %v81 = vunpack.c.l.b16 %v19
  %v82 = vunpack.c.h.b16 %v19
  %v83 = vunpack.c.l.b16 %v20
  %v84 = vunpack.c.h.b16 %v20
  %v85 = vunpack.c.l.b16 %v21
  %v86 = vunpack.c.h.b16 %v21
  %v87 = vunpack.c.l.b16 %v22
  %v88 = vunpack.c.h.b16 %v22
  %v89 = vunpack.c.l.b16 %v23
  %v90 = vunpack.c.h.b16 %v23
  %v91 = vunpack.c.l.b16 %v24
  %v92 = vunpack.c.h.b16 %v24
  %v93 = vunpack.c.l.b16 %v25
  %v94 = vunpack.c.h.b16 %v25
  %v95 = vunpack.c.l.b16 %v26
  %v96 = vunpack.c.h.b16 %v26
  %v97 = vunpack.c.l.b16 %v27
  %v98 = vunpack.c.h.b16 %v27
  %v99 = vunpack.c.l.b16 %v28
  %v100 = vunpack.c.h.b16 %v28
  %v101 = vunpack.c.l.b16 %v29
  %v102 = vunpack.c.h.b16 %v29
  %v103 = vunpack.c.l.b16 %v30
  %v104 = vunpack.c.h.b16 %v30
  %v105 = vpack.c.b16 %v75, %v73
  %v106 = vpack.c.b16 %v76, %v74
  %v107 = vpack.c.b16 %v79, %v77
  %v108 = vpack.c.b16 %v80, %v78
  %v109 = vpack.c.b16 %v83, %v81
  %v110 = vpack.c.b16 %v84, %v82
  %v111 = vpack.c.b16 %v87, %v85
  %v112 = vpack.c.b16 %v88, %v86
  %v113 = vpack.c.b16 %v91, %v89
  %v114 = vpack.c.b16 %v92, %v90
  %v115 = vpack.c.b16 %v95, %v93
  %v116 = vpack.c.b16 %v96, %v94
  %v117 = vpack.c.b16 %v99, %v97
  %v118 = vpack.c.b16 %v100, %v98
  %v119 = vpack.c.b16 %v103, %v101
  %v120 = vpack.c.b16 %v104, %v102
  %v148 = vunpack.c.l.b16 %v31
  %v149 = vunpack.c.l.b16 %v32
  %v150 = vunpack.c.l.b16 %v33
  %v151 = vunpack.c.l.b16 %v34
  %v152 = vunpack.c.l.b16 %v35
  %v153 = vunpack.c.l.b16 %v36
  %v154 = vunpack.c.l.b16 %v37
  %v155 = vunpack.c.l.b16 %v38
  %v156 = vunpack.c.l.b16 %v39
  %v157 = vunpack.c.l.b16 %v40
  %v158 = vunpack.c.l.b16 %v41
  %v159 = vunpack.c.l.b16 %v42
  %v160 = vunpack.c.l.b16 %v43
  %v161 = vunpack.c.l.b16 %v44
  %v162 = vunpack.c.l.b16 %v45
  %v163 = vunpack.c.l.b16 %v46
  %v164 = vunpack.c.l.b16 %v47
  %v165 = vunpack.c.l.b16 %v48
  %v166 = vunpack.c.l.b16 %v49
  %v167 = vpack.c.b16 %v149, %v148
  %v168 = vpack.c.b16 %v151, %v150
  %v169 = vpack.c.b16 %v153, %v152
  %v170 = vpack.c.b16 %v155, %v154
  %v171 = vpack.c.b16 %v157, %v156
  %v172 = vpack.c.b16 %v159, %v158
  %v173 = vpack.c.b16 %v161, %v160
  %v174 = vpack.c.b16 %v163, %v162
  %v175 = vpack.c.b16 %v165, %v164
  %v176 = vpack.c.b16 %v166, %v166
  %vm186 = vcmask 154624
  %v188 = vsel %vm186, %v106, 0
  %v191 = vsel %vm186, %v108, 0
  %v194 = vsel %vm186, %v110, 0
  %v197 = vsel %vm186, %v112, 0
  %v200 = vsel %vm186, %v114, 0
  %v203 = vsel %vm186, %v116, 0
  %v206 = vsel %vm186, %v118, 0
  %v209 = vsel %vm186, %v120, 0
  %vm211 = vcmask 1040384
  %vm212 = vcmask 1041408
  %v213 = vsel %vm211, 4294967295, 65535
  %v214 = vsel %vm212, %v213, 0
  %v216 = vand.u32 %v176, %v214
  %218 = vmatprep.subr.bf16.mxu0 0
  %219 = vmatpush1.bf16.msra.mxu0 %v174
  %220 = vmatprep.subr.bf16.mxu0 0
  %221 = vmatpush1.bf16.msra.mxu0 %v173
  %222 = vmatprep.subr.bf16.mxu0 0
  %223 = vmatpush1.bf16.msra.mxu0 %v172
  %224 = vmatprep.subr.bf16.mxu0 0
  %225 = vmatpush1.bf16.msra.mxu0 %v171
  %226 = vmatprep.subr.bf16.mxu0 0
  %227 = vmatpush1.bf16.msra.mxu0 %v170
  %228 = vmatprep.subr.bf16.mxu0 0
  %229 = vmatpush1.bf16.msra.mxu0 %v169
  %230 = vmatprep.subr.bf16.mxu0 0
  %231 = vmatpush1.bf16.msra.mxu0 %v168
  %232 = vmatprep.subr.bf16.mxu0 0
  %233 = vmatpush1.bf16.msra.mxu0 %v167
  %234 = vmatprep.subr.bf16.mxu0 0
  %235 = vmatpush2.bf16.msra.mxu0 0
  %236 = vmatprep.subr.bf16.mxu0 0
  %237 = vmatpush2.bf16.msra.mxu0 0
  %238 = vmatprep.subr.bf16.mxu0 0
  %239 = vmatpush2.bf16.msra.mxu0 0
  %240 = vmatprep.subr.bf16.mxu0 0
  %241 = vmatpush2.bf16.msra.mxu0 0
  %242 = vmatprep.subr.bf16.mxu0 0
  %243 = vmatpush2.bf16.msra.mxu0 0
  %244 = vmatprep.subr.bf16.mxu0 0
  %245 = vmatpush2.bf16.msra.mxu0 0
  %246 = vmatprep.subr.bf16.mxu0 0
  %247 = vmatpush2.bf16.msra.mxu0 %v216
  %248 = vmatprep.subr.bf16.mxu0 0
  %249 = vmatpush2.bf16.msra.mxu0 %v175
  %250 = vmatprep.mubr.bf16.mxu0 %v188
  %251 = vmatmul.mubr.bf16.gmra.mxu0 %v105
  %v252 = vpop.f32.mrf.mxu0
  %v253 = vadd.f32 %v55, %v252
  %v254 = vpop.f32.mrf.mxu0
  %v255 = vpop.f32.mrf.mxu0
  %v256 = vadd.f32 %v55, %v255
  %v257 = vpop.f32.mrf.mxu0
  %258 = vmatprep.mubr.bf16.mxu0 %v191
  %259 = vmatmul.mubr.bf16.gmra.mxu0 %v107
  %v260 = vpop.f32.mrf.mxu0
  %v261 = vadd.f32 %v55, %v260
  %v262 = vpop.f32.mrf.mxu0
  %v263 = vpop.f32.mrf.mxu0
  %v264 = vadd.f32 %v55, %v263
  %v265 = vpop.f32.mrf.mxu0
  %266 = vmatprep.mubr.bf16.mxu0 %v194
  %267 = vmatmul.mubr.bf16.gmra.mxu0 %v109
  %v268 = vpop.f32.mrf.mxu0
  %v269 = vadd.f32 %v55, %v268
  %v270 = vpop.f32.mrf.mxu0
  %v271 = vpop.f32.mrf.mxu0
  %v272 = vadd.f32 %v55, %v271
  %v273 = vpop.f32.mrf.mxu0
  %274 = vmatprep.mubr.bf16.mxu0 %v197
  %275 = vmatmul.mubr.bf16.gmra.mxu0 %v111
  %v276 = vpop.f32.mrf.mxu0
  %v277 = vadd.f32 %v55, %v276
  %v278 = vpop.f32.mrf.mxu0
  %v279 = vpop.f32.mrf.mxu0
  %v280 = vadd.f32 %v55, %v279
  %v281 = vpop.f32.mrf.mxu0
  %282 = vmatprep.mubr.bf16.mxu0 %v200
  %283 = vmatmul.mubr.bf16.gmra.mxu0 %v113
  %v284 = vpop.f32.mrf.mxu0
  %v285 = vadd.f32 %v55, %v284
  %v286 = vpop.f32.mrf.mxu0
  %v287 = vpop.f32.mrf.mxu0
  %v288 = vadd.f32 %v55, %v287
  %v289 = vpop.f32.mrf.mxu0
  %290 = vmatprep.mubr.bf16.mxu0 %v203
  %291 = vmatmul.mubr.bf16.gmra.mxu0 %v115
  %v292 = vpop.f32.mrf.mxu0
  %v293 = vadd.f32 %v55, %v292
  %v294 = vpop.f32.mrf.mxu0
  %v295 = vpop.f32.mrf.mxu0
  %v296 = vadd.f32 %v55, %v295
  %v297 = vpop.f32.mrf.mxu0
  %298 = vmatprep.mubr.bf16.mxu0 %v206
  %299 = vmatmul.mubr.bf16.gmra.mxu0 %v117
  %v300 = vpop.f32.mrf.mxu0
  %v301 = vadd.f32 %v55, %v300
  %v302 = vpop.f32.mrf.mxu0
  %v303 = vpop.f32.mrf.mxu0
  %v304 = vadd.f32 %v55, %v303
  %v305 = vpop.f32.mrf.mxu0
  %306 = vmatprep.mubr.bf16.mxu0 %v209
  %307 = vmatmul.mubr.bf16.gmra.mxu0 %v119
  %v308 = vpop.f32.mrf.mxu0
  %v309 = vadd.f32 %v55, %v308
  %v310 = vpop.f32.mrf.mxu0
  %v311 = vpop.f32.mrf.mxu0
  %v312 = vadd.f32 %v55, %v311
  %v313 = vpop.f32.mrf.mxu0
  %314 = vdwg.mxu0
  %v315 = vmax.f32 %v253, 0.0
  %v316 = vmax.f32 %v256, 0.0
  %v317 = vmax.f32 %v261, 0.0
  %v318 = vmax.f32 %v264, 0.0
  %v319 = vmax.f32 %v269, 0.0
  %v320 = vmax.f32 %v272, 0.0
  %v321 = vmax.f32 %v277, 0.0
  %v322 = vmax.f32 %v280, 0.0
  %v323 = vmax.f32 %v285, 0.0
  %v324 = vmax.f32 %v288, 0.0
  %v325 = vmax.f32 %v293, 0.0
  %v326 = vmax.f32 %v296, 0.0
  %v327 = vmax.f32 %v301, 0.0
  %v328 = vmax.f32 %v304, 0.0
  %v329 = vmax.f32 %v309, 0.0
  %v330 = vmax.f32 %v312, 0.0
  %v331 = vpack.c.bf16 %v316, %v315
  %v332 = vpack.c.bf16 %v318, %v317
  %v333 = vpack.c.bf16 %v320, %v319
  %v334 = vpack.c.bf16 %v322, %v321
  %v335 = vpack.c.bf16 %v324, %v323
  %v336 = vpack.c.bf16 %v326, %v325
  %v337 = vpack.c.bf16 %v328, %v327
  %v338 = vpack.c.bf16 %v330, %v329
  %v347 = vunpack.c.l.b16 %v331
  %v348 = vunpack.c.h.b16 %v331
  %v349 = vunpack.c.l.b16 %v332
  %v350 = vunpack.c.h.b16 %v332
  %v351 = vunpack.c.l.b16 %v333
  %v352 = vunpack.c.h.b16 %v333
  %v353 = vunpack.c.l.b16 %v334
  %v354 = vunpack.c.h.b16 %v334
  %v355 = vunpack.c.l.b16 %v335
  %v356 = vunpack.c.h.b16 %v335
  %v357 = vunpack.c.l.b16 %v336
  %v358 = vunpack.c.h.b16 %v336
  %v359 = vunpack.c.l.b16 %v337
  %v360 = vunpack.c.h.b16 %v337
  %v361 = vunpack.c.l.b16 %v338
  %v362 = vunpack.c.h.b16 %v338
  %v363 = vpack.c.b16 %v347, %v347
  %v364 = vpack.c.b16 %v348, %v348
  %v365 = vpack.c.b16 %v349, %v349
  %v366 = vpack.c.b16 %v350, %v350
  %v367 = vpack.c.b16 %v351, %v351
  %v368 = vpack.c.b16 %v352, %v352
  %v369 = vpack.c.b16 %v353, %v353
  %v370 = vpack.c.b16 %v354, %v354
  %v371 = vpack.c.b16 %v355, %v355
  %v372 = vpack.c.b16 %v356, %v356
  %v373 = vpack.c.b16 %v357, %v357
  %v374 = vpack.c.b16 %v358, %v358
  %v375 = vpack.c.b16 %v359, %v359
  %v376 = vpack.c.b16 %v360, %v360
  %v377 = vpack.c.b16 %v361, %v361
  %v378 = vpack.c.b16 %v362, %v362
  %vm395 = vcmask 519168
  %396 = vst.msk [vmem:[%s3] sm:$0xf] %vm395, %v363
  %397 = vst.msk [vmem:[%s3 + $0x4] sm:$0xf] %vm395, %v364
  %398 = vst.msk [vmem:[%s3 + $0x8] sm:$0xf] %vm395, %v365
  %399 = vst.msk [vmem:[%s3 + $0xc] sm:$0xf] %vm395, %v366
  %400 = vst.msk [vmem:[%s3 + $0x10] sm:$0xf] %vm395, %v367
  %401 = vst.msk [vmem:[%s3 + $0x14] sm:$0xf] %vm395, %v368
  %402 = vst.msk [vmem:[%s3 + $0x18] sm:$0xf] %vm395, %v369
  %403 = vst.msk [vmem:[%s3 + $0x1c] sm:$0xf] %vm395, %v370
  %404 = vst.msk [vmem:[%s3 + $0x20] sm:$0xf] %vm395, %v371
  %405 = vst.msk [vmem:[%s3 + $0x24] sm:$0xf] %vm395, %v372
  %406 = vst.msk [vmem:[%s3 + $0x28] sm:$0xf] %vm395, %v373
  %407 = vst.msk [vmem:[%s3 + $0x2c] sm:$0xf] %vm395, %v374
  %408 = vst.msk [vmem:[%s3 + $0x30] sm:$0xf] %vm395, %v375
  %409 = vst.msk [vmem:[%s3 + $0x34] sm:$0xf] %vm395, %v376
  %410 = vst.msk [vmem:[%s3 + $0x38] sm:$0xf] %vm395, %v377
  %411 = vst.msk [vmem:[%s3 + $0x3c] sm:$0xf] %vm395, %v378
  // Predicated region
  $region14: #{tpu_custom_call.1} parent=0 // pred_check
    _
  $region15: #{tpu_custom_call.1} parent=0 // pred_check_branch
    %413 = sbr.rel (0) target = $region17
  $region16: #{tpu_custom_call.1} parent=0 // pred_region
    _
  $region17: #{tpu_custom_call.1} parent=0 // pred_fallthru
    _
  // Predicated region
  $region18: #{tpu_custom_call.1} parent=0 // pred_check
    _
  $region19: #{tpu_custom_call.1} parent=0 // pred_check_branch
    %415 = sbr.rel (0) target = $region21
  $region20: #{tpu_custom_call.1} parent=0 // pred_region
    _
  $region21: #{tpu_custom_call.1} parent=0 // pred_fallthru
    _

</llo_original>
